<compile_context>
chip_gen: v5e
topology: v5e:2x2
jax: 0.10.0
libtpu: 0.0.40
codegen_flags: <defaults>
</compile_context>

<pallas_src>
import functools

import jax
import jax.numpy as jnp
from jax.experimental import pallas as pl
from jax.experimental.pallas import tpu as pltpu


def _channel_bound_kernel(x_ref, o_ref, *, exponent):
    # x_ref / o_ref hold a (TR, H*W) tile: TR whole channel planes, lane-dense.
    x = x_ref[...]
    if exponent == 1.0:
        # polarization == 0: torch.pow(x, 1.0) == x; skip all EUP work.
        tx = x
    else:
        # torch.pow semantics (NaN for negative base with fractional exponent)
        # are reproduced by jnp.power.
        tx = jnp.power(x, jnp.asarray(exponent, dtype=x.dtype))
    # Per-channel (per-row) max of |tx|, kept as a (TR, 1) column.
    maxi = jnp.max(jnp.abs(tx), axis=-1, keepdims=True)
    # One reciprocal per channel + a single VPU multiply per element
    # (instead of a per-element divide).
    inv = 1.0 / maxi
    o_ref[...] = tx * inv


def _choose_row_block(nc, row_bytes, target_bytes=2 << 20):
    """Rows per block: ~2 MiB blocks, multiple of 8 (sublane) unless full extent."""
    tr = max(1, target_bytes // max(1, row_bytes))
    if tr >= nc:
        tr = nc  # full second-minor extent -> (8,128) constraint exempt
        if nc >= 16:
            # Keep >= 2 grid steps so v7x's two TensorCores both get work.
            half = -(-((nc + 1) // 2) // 8) * 8
            tr = min(tr, half)
    else:
        tr = (tr // 8) * 8
        if tr == 0:
            # A single channel plane exceeds the target block size.
            # TODO(synk): for very large H*W, tile within a plane (two-pass
            # max + scale) instead of loading 8 full planes per block.
            tr = 8 if nc >= 8 else nc
    return int(tr)


def channel_bound(x, polarization: int = 0):
    """Pallas implementation of ChannelBound.forward for NCHW input."""
    N, C, H, W = x.shape
    exponent = 1.0 / (2 * polarization + 1)

    NC = N * C
    HW = H * W
    itemsize = jnp.dtype(x.dtype).itemsize
    row_bytes = HW * itemsize

    tr = _choose_row_block(NC, row_bytes)
    block_bytes = tr * row_bytes

    # Double-buffered input + output blocks; raise the scoped-VMEM limit only
    # if the default (16 MiB on v5e) might not cover it.
    vmem_limit = None
    if 4 * block_bytes > (12 << 20):
        vmem_limit = int(min(4 * block_bytes + (4 << 20), 48 << 20))

    kernel = functools.partial(_channel_bound_kernel, exponent=exponent)

    x2 = x.reshape(NC, HW)  # free for contiguous NCHW

    out2 = pl.pallas_call(
        kernel,
        out_shape=jax.ShapeDtypeStruct((NC, HW), x.dtype),
        grid=(pl.cdiv(NC, tr),),
        in_specs=[
            # Last dim equals the full array extent (H*W), so the lane constraint
            # is satisfied; second-minor is either a multiple of 8 or full extent.
            pl.BlockSpec((tr, HW), lambda r: (r, 0)),
        ],
        out_specs=pl.BlockSpec((tr, HW), lambda r: (r, 0)),
        compiler_params=pltpu.CompilerParams(
            dimension_semantics=("parallel",),
            vmem_limit_bytes=vmem_limit,
        ),
    )(x2)

    return out2.reshape(N, C, H, W)


def channel_bound_ref(x, polarization: int = 0):
    """Pure-JAX reference mirroring the PyTorch forward."""
    exponent = 1.0 / (2 * polarization + 1)
    tx = jnp.power(x, jnp.asarray(exponent, dtype=x.dtype))
    maxi = jnp.max(jnp.abs(tx), axis=(-1, -2), keepdims=True)
    return tx / maxi


if __name__ == "__main__":
    key = jax.random.PRNGKey(0)
    # Small NCHW input: batch=2, channels=4, spatial=16x16.
    x = jax.random.normal(key, (2, 4, 16, 16), dtype=jnp.float32)

    out = channel_bound(x, polarization=0)
    out = jax.block_until_ready(out)

    ref = channel_bound_ref(x, polarization=0)
    assert out.shape == x.shape and out.dtype == x.dtype
    assert jnp.allclose(out, ref, atol=1e-6, rtol=1e-6)

    print("KERNEL_OK")
</pallas_src>

<mosaic_0001>
module attributes {stable_mosaic.version = 11 : i64} {
  func.func @_channel_bound_kernel(%arg0: i32, %arg1: memref<8x256xf32, #tpu.memory_space<vmem>>, %arg2: memref<8x256xf32, #tpu.memory_space<vmem>>) attributes {dimension_semantics = [#tpu.dimension_semantics<parallel>], iteration_bounds = array<i64: 1>, scalar_prefetch = 0 : i64, scratch_operands = 0 : i64, tpu.core_type = #tpu.core_type<tc>, window_params = [{transform_indices = @transform_0, window_bounds = array<i64: 8, 256>}, {transform_indices = @transform_1, window_bounds = array<i64: 8, 256>}]} {
    %c0 = arith.constant 0 : index
    %c0_0 = arith.constant 0 : index
    %0 = vector.load %arg1[%c0, %c0_0] : memref<8x256xf32, #tpu.memory_space<vmem>>, vector<8x256xf32>
    %1 = math.absf %0 : vector<8x256xf32>
    %cst = arith.constant dense<0xFF800000> : vector<8xf32>
    %2 = vector.multi_reduction <maximumf>, %1, %cst [1] : vector<8x256xf32> to vector<8xf32>
    %3 = vector.shape_cast %2 : vector<8xf32> to vector<8x1xf32>
    %cst_1 = arith.constant 1.000000e+00 : f32
    %4 = vector.broadcast %cst_1 : f32 to vector<8x1xf32>
    %5 = arith.divf %4, %3 : vector<8x1xf32>
    %6 = vector.broadcast %5 : vector<8x1xf32> to vector<8x256xf32>
    %7 = arith.mulf %0, %6 : vector<8x256xf32>
    %c0_2 = arith.constant 0 : index
    %c0_3 = arith.constant 0 : index
    %8 = vector.load %arg2[%c0_2, %c0_3] : memref<8x256xf32, #tpu.memory_space<vmem>>, vector<8x256xf32>
    tpu.vector_store %arg2[%c0_2, %c0_3], %7 {strides = array<i32>} : memref<8x256xf32, #tpu.memory_space<vmem>>, vector<8x256xf32>,
    return
  }
  func.func @transform_0(%arg0: i32) -> (i32, i32) {
    %c0_i32 = arith.constant 0 : i32
    %c0_i32_0 = arith.constant 0 : i32
    return %arg0, %c0_i32 : i32, i32
  }
  func.func @transform_1(%arg0: i32) -> (i32, i32) {
    %c0_i32 = arith.constant 0 : i32
    %c0_i32_0 = arith.constant 0 : i32
    return %arg0, %c0_i32 : i32, i32
  }
}

</mosaic_0001>

<llo_original>
// kernel: tpu_custom_call.1
$region0: #{tpu_custom_call.1}
  #allocation0 [shape = 'u32[]', space=smem, size = 0x4, offset = 0x4, fixed_abs, tag = 'smem constant byte address 0x4 - core index']
  #allocation1 [shape = 'u32[72,128]{1,0:T(1,128)}', space=vmem, size = 0x9000, scoped, tag = 'internal scratch']
  %s0 = inlined_call_operand.hbm [shape: f32[8,256], index: 0, kind: input, shape index: {}]
  %s1 = inlined_call_operand.hbm [shape: f32[8,256], index: 1, kind: output, shape index: {}]
  %s2 = sld [smem:[#allocation0]]
  $region18: #{tpu_custom_call.1} parent=0
    _
  %s4 = ssub.s32 1, %s2
  %s5 = scalar_select 0, %s4, %s2
  $region1: #{tpu_custom_call.1} parent=0
    #allocation2 [shape = 'u8[8192]{0}', space=vmem, size = 0x2000, scoped, tag = 'input window, operand 0, single buffered']
    #allocation3 [shape = 's32[1]{0}', space=sflag, size = 0x4, scoped, tag = 'scoped memory for tpu_custom_call.1']
    #allocation4 [shape = 's32[1]{0}', space=sflag, size = 0x4, scoped, tag = 'scoped memory for tpu_custom_call.1']
    #allocation5 [shape = 'u8[8192]{0}', space=vmem, size = 0x2000, scoped, tag = 'output window, operand 0, single buffered']
    %6 = vsyncpa [#allocation3], 0
    %7 = vsyncpa [#allocation4], 0
    // Predicated region
    $region2: #{tpu_custom_call.1} parent=1 // pred_check
      _
    $region3: #{tpu_custom_call.1} parent=1 // pred_check_branch
      %9 = sbr.rel (0) target = $region5
    $region4: #{tpu_custom_call.1} parent=1 // pred_region
      %11 = vsyncadd [#allocation3], 0
      %s13 = sshll.u32 %s0, 4
      %s14 = int_to_ptr.hbm [resolvable:$true] %s13
      %s15 = sshll.u32 [#allocation2], 4
      %s16 = int_to_ptr.vmem [resolvable:$true] %s15
      %18 = dma.hbm_to_vmem [thread:$0]  %s14, 256, %s16, [#allocation3]
    $region5: #{tpu_custom_call.1} parent=1 // pred_fallthru
      _
    // Predicated region
    $region6: #{tpu_custom_call.1} parent=1 // pred_check
      _
    $region7: #{tpu_custom_call.1} parent=1 // pred_check_branch
      %20 = sbr.rel (0) target = $region9
    $region8: #{tpu_custom_call.1} parent=1 // pred_region
      %22 = dma.done [#allocation3], 256
    $region9: #{tpu_custom_call.1} parent=1 // pred_fallthru
      _
    %v23 = vld [vmem:[#allocation2] sm:$0xff]
    %v24 = vld [vmem:[#allocation2 + $0x8] sm:$0xff]
    %v25 = vand.u32 2147483647, %v23
    %v26 = vand.u32 2147483647, %v24
    %v27 = vmax.f32 %v25, %v26
    %28 = vmax.xlane.f32.xlu0 %v27
    %v29 = vpop.xlane.xlu0 %28
    %v30 = vrcp.pop %v29
    %v31 = vmul.f32 %v29, %v30
    %v32 = vsub.f32 1.0, %v31
    %v33 = vmul.f32 %v30, %v32
    %v34 = vadd.f32 %v30, %v33
    %vm35 = vweird.f32 %v29
    %vm36 = vweird.f32 %v30
    %vm37 = vmor %vm35, %vm36
    %v38 = vsel %vm37, %v30, %v34
    %v39 = vand.u32 2147483647, %v29
    %vm40 = vcmp.eq.f32.partialorder %v39, 8.507059e+37
    %v41 = vand.u32 %v29, 2147483648
    %v42 = vor.u32 1.1754944e-38, %v41
    %v43 = vsel %vm40, %v42, %v38
    %v44 = vmul.f32 1.0, %v43
    %v45 = vmul.f32 %v23, %v44
    %v46 = vmul.f32 %v24, %v44
    %47 = vst [vmem:[#allocation5] sm:$0xff] %v45
    %48 = vst [vmem:[#allocation5 + $0x8] sm:$0xff] %v46
    // Predicated region
    $region10: #{tpu_custom_call.1} parent=1 // pred_check
      _
    $region11: #{tpu_custom_call.1} parent=1 // pred_check_branch
      %50 = sbr.rel (0) target = $region13
    $region12: #{tpu_custom_call.1} parent=1 // pred_region
      %52 = vsyncadd [#allocation4], 0
      %s54 = sshll.u32 [#allocation5], 4
      %s55 = int_to_ptr.vmem [resolvable:$true] %s54
      %s56 = sshll.u32 %s1, 4
      %s57 = int_to_ptr.hbm [resolvable:$true] %s56
      %59 = dma.vmem_to_hbm [thread:$0]  %s55, 256, %s57, [#allocation4]
    $region13: #{tpu_custom_call.1} parent=1 // pred_fallthru
      _
    // Predicated region
    $region14: #{tpu_custom_call.1} parent=1 // pred_check
      _
    $region15: #{tpu_custom_call.1} parent=1 // pred_check_branch
      %61 = sbr.rel (0) target = $region17
    $region16: #{tpu_custom_call.1} parent=1 // pred_region
      %63 = dma.done [#allocation4], 256
    $region17: #{tpu_custom_call.1} parent=1 // pred_fallthru
      _
    %64 = vsyncpa [#allocation3], 1
    %65 = vsyncpa [#allocation4], 1

</llo_original>
